<compile_context>
chip_gen: v7x
topology: tpu7x:2x2x1
jax: 0.10.0
libtpu: 0.0.40
codegen_flags: <defaults>
</compile_context>

<pallas_src>
import math

import jax
import jax.numpy as jnp
from jax.experimental import pallas as pl
from jax.experimental.pallas import tpu as pltpu


def _round_up(x, m):
    return ((x + m - 1) // m) * m


def _probe_eval_kernel(x_ref, w_ref, b_ref, o_ref):
    """relu(x) @ W + b on one (TILE_N, D) block.  W is already (D, C)."""
    x = jnp.maximum(x_ref[...], 0.0)
    out = jnp.dot(x, w_ref[...], preferred_element_type=jnp.float32)
    o_ref[...] = (out + b_ref[...]).astype(o_ref.dtype)


def _probe_train_kernel(x_ref, m_ref, w_ref, b_ref, o_ref):
    """relu(x * dropout_mask) @ W + b.  mask already carries the 1/(1-p) scale."""
    x = jnp.maximum(x_ref[...] * m_ref[...], 0.0)
    out = jnp.dot(x, w_ref[...], preferred_element_type=jnp.float32)
    o_ref[...] = (out + b_ref[...]).astype(o_ref.dtype)


def convnet_linear_probe(embed, w, b, *, key=None, training=False, p=0.5,
                         tile_n=2048):
    """embed: (N, 50); w: (C, 50) (PyTorch layout); b: (C,). Returns (N, C)."""
    N, D = embed.shape
    C = w.shape[0]

    wt = jnp.asarray(w).T.astype(embed.dtype)       # (D, C): one-time transpose
    b2d = jnp.asarray(b).reshape(1, C).astype(jnp.float32)

    # Tile the batch dim; keep tiles multiples of 8 (sublane) and <= tile_n.
    tn = min(tile_n, _round_up(N, 8))
    n_pad = pl.cdiv(N, tn) * tn
    x = embed if n_pad == N else jnp.pad(embed, ((0, n_pad - N), (0, 0)))

    operands = [x]
    in_specs = [pl.BlockSpec((tn, D), lambda i: (i, 0))]

    if training:
        if key is None:
            key = jax.random.PRNGKey(0)
        keep = jax.random.bernoulli(key, 1.0 - p, (N, D))
        mask = keep.astype(embed.dtype) * jnp.asarray(1.0 / (1.0 - p), embed.dtype)
        if n_pad != N:
            mask = jnp.pad(mask, ((0, n_pad - N), (0, 0)))
        operands.append(mask)
        in_specs.append(pl.BlockSpec((tn, D), lambda i: (i, 0)))
        kernel = _probe_train_kernel
    else:
        kernel = _probe_eval_kernel

    # Weight and bias: constant index map -> resident in VMEM across all steps.
    operands += [wt, b2d]
    in_specs += [
        pl.BlockSpec((D, C), lambda i: (0, 0)),
        pl.BlockSpec((1, C), lambda i: (0, 0)),
    ]

    out = pl.pallas_call(
        kernel,
        out_shape=jax.ShapeDtypeStruct((n_pad, C), embed.dtype),
        grid=(n_pad // tn,),
        in_specs=in_specs,
        out_specs=pl.BlockSpec((tn, C), lambda i: (i, 0)),
        compiler_params=pltpu.CompilerParams(
            dimension_semantics=("parallel",)),
    )(*operands)

    return out[:N]


def init_params(num_classes, key):
    """Deterministic init matching nn.Linear(50, C) (uniform +-1/sqrt(fan_in))."""
    in_features = 50
    out_features = 1 if num_classes == 2 else num_classes
    kw, kb = jax.random.split(key)
    bound = 1.0 / math.sqrt(in_features)
    w = jax.random.uniform(kw, (out_features, in_features), jnp.float32, -bound, bound)
    b = jax.random.uniform(kb, (out_features,), jnp.float32, -bound, bound)
    return w, b


if __name__ == "__main__":
    key = jax.random.PRNGKey(0)
    k_embed, k_params, k_drop = jax.random.split(key, 3)

    num_classes = 5          # -> fc2: Linear(50, 5)
    batch = 8
    D = 50
    embed = jax.random.normal(k_embed, (batch, D), dtype=jnp.float32)
    w, b = init_params(num_classes, k_params)

    # Eval-mode forward (dropout is identity), matching model.eval() inference.
    out = jax.block_until_ready(convnet_linear_probe(embed, w, b, training=False))
    ref = jnp.maximum(embed, 0.0) @ w.T + b
    assert out.shape == (batch, num_classes)
    assert jnp.allclose(out, ref, atol=1e-5, rtol=1e-5), "eval mismatch vs reference"

    # Training-mode forward (stochastic dropout via host-generated mask).
    p = 0.5
    out_train = jax.block_until_ready(
        convnet_linear_probe(embed, w, b, key=k_drop, training=True, p=p))
    keep = jax.random.bernoulli(k_drop, 1.0 - p, (batch, D)).astype(jnp.float32)
    ref_train = jnp.maximum(embed * keep * (1.0 / (1.0 - p)), 0.0) @ w.T + b
    assert out_train.shape == out.shape
    assert jnp.allclose(out_train, ref_train, atol=1e-5, rtol=1e-5), \
        "train mismatch vs reference"

    print("KERNEL_OK")
</pallas_src>

<mosaic_0001>
module attributes {stable_mosaic.version = 11 : i64} {
  func.func @_probe_eval_kernel(%arg0: i32, %arg1: memref<8x50xf32, #tpu.memory_space<vmem>>, %arg2: memref<50x5xf32, #tpu.memory_space<vmem>>, %arg3: memref<1x5xf32, #tpu.memory_space<vmem>>, %arg4: memref<8x5xf32, #tpu.memory_space<vmem>>) attributes {dimension_semantics = [#tpu.dimension_semantics<parallel>], iteration_bounds = array<i64: 1>, scalar_prefetch = 0 : i64, scratch_operands = 0 : i64, tpu.core_type = #tpu.core_type<tc>, window_params = [{transform_indices = @transform_0, window_bounds = array<i64: 8, 50>}, {pipeline_mode = #tpu.pipeline_mode<synchronous>, transform_indices = @transform_1, window_bounds = array<i64: 50, 5>}, {pipeline_mode = #tpu.pipeline_mode<synchronous>, transform_indices = @transform_2, window_bounds = array<i64: 1, 5>}, {transform_indices = @transform_3, window_bounds = array<i64: 8, 5>}]} {
    %c0 = arith.constant 0 : index
    %c0_0 = arith.constant 0 : index
    %0 = vector.load %arg1[%c0, %c0_0] : memref<8x50xf32, #tpu.memory_space<vmem>>, vector<8x50xf32>
    %cst = arith.constant 0.000000e+00 : f32
    %1 = vector.broadcast %cst : f32 to vector<8x50xf32>
    %2 = arith.maximumf %0, %1 : vector<8x50xf32>
    %c0_1 = arith.constant 0 : index
    %c0_2 = arith.constant 0 : index
    %3 = vector.load %arg2[%c0_1, %c0_2] : memref<50x5xf32, #tpu.memory_space<vmem>>, vector<50x5xf32>
    %cst_3 = arith.constant dense<0.000000e+00> : vector<8x5xf32>
    %4 = tpu.matmul %2, %3, %cst_3 {dimension_numbers = #tpu.dot_dimension_numbers<[1], [0], [0], [1], [0, 0, 1, 1], [], []>} : vector<8x50xf32>, vector<50x5xf32>, vector<8x5xf32> -> vector<8x5xf32>
    %c0_4 = arith.constant 0 : index
    %c0_5 = arith.constant 0 : index
    %5 = vector.load %arg3[%c0_4, %c0_5] : memref<1x5xf32, #tpu.memory_space<vmem>>, vector<1x5xf32>
    %6 = vector.broadcast %5 : vector<1x5xf32> to vector<8x5xf32>
    %7 = arith.addf %4, %6 : vector<8x5xf32>
    %c0_6 = arith.constant 0 : index
    %c0_7 = arith.constant 0 : index
    %8 = vector.load %arg4[%c0_6, %c0_7] : memref<8x5xf32, #tpu.memory_space<vmem>>, vector<8x5xf32>
    tpu.vector_store %arg4[%c0_6, %c0_7], %7 {strides = array<i32>} : memref<8x5xf32, #tpu.memory_space<vmem>>, vector<8x5xf32>,
    return
  }
  func.func @transform_0(%arg0: i32) -> (i32, i32) {
    %c0_i32 = arith.constant 0 : i32
    %c0_i32_0 = arith.constant 0 : i32
    return %arg0, %c0_i32 : i32, i32
  }
  func.func @transform_1(%arg0: i32) -> (i32, i32) {
    %c0_i32 = arith.constant 0 : i32
    %c0_i32_0 = arith.constant 0 : i32
    %c0_i32_1 = arith.constant 0 : i32
    return %c0_i32, %c0_i32_0 : i32, i32
  }
  func.func @transform_2(%arg0: i32) -> (i32, i32) {
    %c0_i32 = arith.constant 0 : i32
    %c0_i32_0 = arith.constant 0 : i32
    %c0_i32_1 = arith.constant 0 : i32
    return %c0_i32, %c0_i32_0 : i32, i32
  }
  func.func @transform_3(%arg0: i32) -> (i32, i32) {
    %c0_i32 = arith.constant 0 : i32
    %c0_i32_0 = arith.constant 0 : i32
    return %arg0, %c0_i32 : i32, i32
  }
}

</mosaic_0001>

<llo_original>
// kernel: tpu_custom_call.1
$region0: #{tpu_custom_call.1}
  #allocation0 [shape = 'u32[]', space=smem, size = 0x4, offset = 0x4, fixed_abs, tag = 'smem constant byte address 0x4 - core index']
  #allocation1 [shape = 'u32[144,128]{1,0:T(1,128)}', space=vmem, size = 0x12000, scoped, tag = 'internal scratch']
  %s0 = inlined_call_operand.vmem [shape: f32[8,50], index: 0, kind: input, shape index: {}]
  %s1 = inlined_call_operand.vmem [shape: f32[50,5], index: 1, kind: input, shape index: {}]
  %s2 = inlined_call_operand.vmem [shape: f32[1,5], index: 2, kind: input, shape index: {}]
  %s3 = inlined_call_operand.hbm [shape: f32[8,5], index: 3, kind: output, shape index: {}]
  %s4 = sld [smem:[#allocation0]]
  $region22: #{tpu_custom_call.1} parent=0
    _
  %s6 = ssub.s32 1, %s4
  %s7 = scalar_select 0, %s6, %s4
  $region1: #{tpu_custom_call.1} parent=0
    #allocation2 [shape = 'u8[4096]{0}', space=vmem, size = 0x1000, scoped, tag = 'output window, operand 0, single buffered']
    #allocation3 [shape = 's32[1]{0}', space=sflag, size = 0x4, scoped, tag = 'scoped memory for tpu_custom_call.1']
    %8 = vsyncpa [#allocation3], 0
    // Predicated region
    $region2: #{tpu_custom_call.1} parent=1 // pred_check
      _
    $region3: #{tpu_custom_call.1} parent=1 // pred_check_branch
      %10 = sbr.rel (0) target = $region5
    $region4: #{tpu_custom_call.1} parent=1 // pred_region
      _
    $region5: #{tpu_custom_call.1} parent=1 // pred_fallthru
      _
    // Predicated region
    $region6: #{tpu_custom_call.1} parent=1 // pred_check
      _
    $region7: #{tpu_custom_call.1} parent=1 // pred_check_branch
      %12 = sbr.rel (0) target = $region9
    $region8: #{tpu_custom_call.1} parent=1 // pred_region
      _
    $region9: #{tpu_custom_call.1} parent=1 // pred_fallthru
      _
    // Predicated region
    $region10: #{tpu_custom_call.1} parent=1 // pred_check
      _
    $region11: #{tpu_custom_call.1} parent=1 // pred_check_branch
      %14 = sbr.rel (0) target = $region13
    $region12: #{tpu_custom_call.1} parent=1 // pred_region
      _
    $region13: #{tpu_custom_call.1} parent=1 // pred_fallthru
      _
    %v15 = vld [vmem:[%s0] sm:$0xff]
    %v16 = vmax.f32 %v15, 0.0
    %v17 = vld [vmem:[%s1] sm:$0xff]
    %v18 = vld [vmem:[%s1 + $0x8] sm:$0xff]
    %v19 = vld [vmem:[%s1 + $0x10] sm:$0xff]
    %v20 = vld [vmem:[%s1 + $0x18] sm:$0xff]
    %v21 = vld [vmem:[%s1 + $0x20] sm:$0xff]
    %v22 = vld [vmem:[%s1 + $0x28] sm:$0xff]
    %v23 = vld [vmem:[%s1 + $0x30] sm:$0x3]
    %v24 = vld [vmem:[%s2] sm:$0x1]
    %v26 = vlaneseq
    %v27 = vshrl.u32 %v26, 7
    %v28 = vsub.s32 0, %v27
    %v29 = vrot.slane %v24, %v28
    %vm31 = vcmask 408576
    %v33 = vsel %vm31, %v16, 0
    %vm35 = vcmask 1041408
    %v37 = vsel %vm35, %v23, 0
    %39 = vmatprep.subr.mxu0 0.0
    %40 = vmatpush1.msra.mxu0 %v17
    %41 = vmatprep.subr.mxu0 0.0
    %42 = vmatpush1.msra.mxu0 %v18
    %43 = vmatprep.subr.mxu0 0.0
    %44 = vmatpush1.msra.mxu0 %v19
    %45 = vmatprep.subr.mxu0 0.0
    %46 = vmatpush1.msra.mxu0 %v20
    %47 = vmatprep.subr.mxu0 0.0
    %48 = vmatpush1.msra.mxu0 %v21
    %49 = vmatprep.subr.mxu0 0.0
    %50 = vmatpush1.msra.mxu0 %v22
    %51 = vmatprep.subr.mxu0 0.0
    %52 = vmatpush1.msra.mxu0 %v37
    %53 = vmatprep.subr.mxu0 0.0
    %54 = vmatpush1.msra.mxu0 0.0
    %55 = vmatprep.subr.mxu0 0.0
    %56 = vmatpush1.msra.mxu0 0.0
    %57 = vmatprep.subr.mxu0 0.0
    %58 = vmatpush1.msra.mxu0 0.0
    %59 = vmatprep.subr.mxu0 0.0
    %60 = vmatpush1.msra.mxu0 0.0
    %61 = vmatprep.subr.mxu0 0.0
    %62 = vmatpush1.msra.mxu0 0.0
    %63 = vmatprep.subr.mxu0 0.0
    %64 = vmatpush1.msra.mxu0 0.0
    %65 = vmatprep.subr.mxu0 0.0
    %66 = vmatpush1.msra.mxu0 0.0
    %67 = vmatprep.subr.mxu0 0.0
    %68 = vmatpush1.msra.mxu0 0.0
    %69 = vmatprep.subr.mxu0 0.0
    %70 = vmatpush1.msra.mxu0 0.0
    %71 = vmatprep.subr.mxu0 0.0
    %72 = vmatpush1.msra.mxu0 0.0
    %73 = vmatprep.subr.mxu0 0.0
    %74 = vmatpush1.msra.mxu0 0.0
    %75 = vmatprep.subr.mxu0 0.0
    %76 = vmatpush1.msra.mxu0 0.0
    %77 = vmatprep.subr.mxu0 0.0
    %78 = vmatpush1.msra.mxu0 0.0
    %79 = vmatprep.subr.mxu0 0.0
    %80 = vmatpush1.msra.mxu0 0.0
    %81 = vmatprep.subr.mxu0 0.0
    %82 = vmatpush1.msra.mxu0 0.0
    %83 = vmatprep.subr.mxu0 0.0
    %84 = vmatpush1.msra.mxu0 0.0
    %85 = vmatprep.subr.mxu0 0.0
    %86 = vmatpush1.msra.mxu0 0.0
    %87 = vmatprep.subr.mxu0 0.0
    %88 = vmatpush1.msra.mxu0 0.0
    %89 = vmatprep.subr.mxu0 0.0
    %90 = vmatpush1.msra.mxu0 0.0
    %91 = vmatprep.subr.mxu0 0.0
    %92 = vmatpush1.msra.mxu0 0.0
    %93 = vmatprep.subr.mxu0 0.0
    %94 = vmatpush1.msra.mxu0 0.0
    %95 = vmatprep.subr.mxu0 0.0
    %96 = vmatpush1.msra.mxu0 0.0
    %97 = vmatprep.subr.mxu0 0.0
    %98 = vmatpush1.msra.mxu0 0.0
    %99 = vmatprep.subr.mxu0 0.0
    %100 = vmatpush1.msra.mxu0 0.0
    %101 = vmatprep.subr.mxu0 0.0
    %102 = vmatpush1.msra.mxu0 0.0
    %103 = vmatprep.mubr.f32.mxu0 0.0
    %104 = vmatmul.mubr.f32.gmra.mrb[0].mxu0 %v33
    %v105 = vpop.f32.mrb[0].mxu0
    %v106 = vadd.f32 %v29, %v105
    %v107 = vpop.f32.mrb[0].mxu0
    %108 = vdwg.mxu0
    %vm109 = vcmask 39936
    %110 = vst.msk [vmem:[#allocation2] sm:$0xff] %vm109, %v106
    // Predicated region
    $region14: #{tpu_custom_call.1} parent=1 // pred_check
      _
    $region15: #{tpu_custom_call.1} parent=1 // pred_check_branch
      %112 = sbr.rel (0) target = $region17
    $region16: #{tpu_custom_call.1} parent=1 // pred_region
      %s114 = ssub.s32 128, 128
      %115 = vsyncadd [#allocation3], %s114
      %s117 = sshll.u32 [#allocation2], 4
      %s118 = int_to_ptr.vmem [resolvable:$true] %s117
      %120 = dma.vmem_to_hbm [thread:$0]  %s118, 128, %s3, [#allocation3]
    $region17: #{tpu_custom_call.1} parent=1 // pred_fallthru
      _
    // Predicated region
    $region18: #{tpu_custom_call.1} parent=1 // pred_check
      _
    $region19: #{tpu_custom_call.1} parent=1 // pred_check_branch
      %122 = sbr.rel (0) target = $region21
    $region20: #{tpu_custom_call.1} parent=1 // pred_region
      %123 = dma.done [#allocation3], 128
    $region21: #{tpu_custom_call.1} parent=1 // pred_fallthru
      _
    %124 = vsyncpa [#allocation3], 1

</llo_original>
